<compile_context>
chip_gen: v7x
topology: tpu7x:2x2x1
jax: 0.10.0
libtpu: 0.0.40
codegen_flags: <defaults>
</compile_context>

<pallas_src>
import math
import numpy as np
import jax
import jax.numpy as jnp
from jax import lax
from jax.experimental import pallas as pl
from jax.experimental.pallas import tpu as pltpu


def vocal_attention_kernel(x_ref, wqkv_ref, bqkv_ref, o_ref):
    bt, s, h = x_ref.shape

    # Fold the Bt batch elements into the row dim: one big fused QKV projection.
    x2d = x_ref[...].reshape(bt * s, h).astype(jnp.bfloat16)            # (Bt*S, H)
    qkv = jnp.dot(x2d, wqkv_ref[...],
                  preferred_element_type=jnp.float32) + bqkv_ref[...]   # (Bt*S, 3H) f32
    qkv = qkv.reshape(bt, s, 3 * h)

    # scale already folded into Wq/bq; vocal_mask already folded into Wv/bv.
    q = qkv[:, :, :h].astype(jnp.bfloat16)
    k = qkv[:, :, h:2 * h].astype(jnp.bfloat16)
    v = qkv[:, :, 2 * h:].astype(jnp.bfloat16)

    # scores = q @ k^T : contract last axes of both, batch over dim 0 (no transpose).
    scores = lax.dot_general(q, k, (((2,), (2,)), ((0,), (0,))),
                             preferred_element_type=jnp.float32)        # (Bt, S, S)

    # numerically-stable softmax, all in f32
    m = jnp.max(scores, axis=-1, keepdims=True)
    e = jnp.exp(scores - m)
    denom = jnp.sum(e, axis=-1, keepdims=True)
    attn = e * pl.reciprocal(denom, approx=True)

    out = lax.dot_general(attn.astype(jnp.bfloat16), v,
                          (((2,), (1,)), ((0,), (0,))),
                          preferred_element_type=jnp.float32)           # (Bt, S, H)
    o_ref[...] = out.astype(o_ref.dtype)


def _pick_batch_tile(B, S, H):
    """Batch elements per grid step.

    Aim for >= 256 MXU rows per step, but cap the per-step f32 intermediate
    footprint (scores/exp/attn + qkv + x/out) at ~8 MiB so the double-buffered
    pipeline stays well inside the scoped VMEM limit on every chip generation.
    Bt must divide B.
    """
    target = max(1, -(-256 // S))                    # ceil(256 / S)
    per_elem_bytes = 3 * S * S * 4 + S * 3 * H * 4 + 3 * S * H * 4
    cap = max(1, (8 << 20) // max(per_elem_bytes, 1))
    bt = max(1, min(B, target, cap))
    while B % bt:
        bt -= 1
    return bt


def vocal_attention(x, wq, bq, wk, bk, wv, bv, vocal_mask):
    """x: (B, S, H); w*: (H, H) pre-transposed (in, out); b*: (1, H);
    vocal_mask: (1, 1, num_bins) with num_bins >= H (as the PyTorch slice implies)."""
    B, S, H = x.shape
    scale = 1.0 / math.sqrt(float(H))
    mask = vocal_mask[0, :, :H].astype(jnp.float32)          # (1, H)

    # One-time parameter folds (tiny tensors, done in the wrapper):
    #   Wq <- Wq * scale, bq <- bq * scale        (softmax scale)
    #   Wv <- Wv * mask,  bv <- bv * mask         (vocal mask, per output column)
    wqkv = jnp.concatenate([wq * scale, wk, wv * mask], axis=1).astype(jnp.bfloat16)
    bqkv = jnp.concatenate([bq * scale, bk, bv * mask], axis=1).astype(jnp.float32)

    bt = _pick_batch_tile(B, S, H)
    grid = (B // bt,)
    const2d = lambda i: (0, 0)

    flops = 2 * B * (3 * S * H * H + 2 * S * S * H)
    bytes_accessed = int(x.size * 4 + wqkv.size * 2 + bqkv.size * 4 + B * S * H * 4)

    return pl.pallas_call(
        vocal_attention_kernel,
        out_shape=jax.ShapeDtypeStruct((B, S, H), jnp.float32),
        grid_spec=pltpu.PrefetchScalarGridSpec(
            num_scalar_prefetch=0,
            grid=grid,
            in_specs=[
                pl.BlockSpec((bt, S, H), lambda i: (i, 0, 0)),   # x
                pl.BlockSpec((H, 3 * H), const2d),               # fused Wqkv (bf16)
                pl.BlockSpec((1, 3 * H), const2d),               # fused bias (f32)
            ],
            out_specs=pl.BlockSpec((bt, S, H), lambda i: (i, 0, 0)),
        ),
        compiler_params=pltpu.CompilerParams(
            dimension_semantics=("parallel",)),
        cost_estimate=pl.CostEstimate(
            flops=flops,
            transcendentals=B * S * S,
            bytes_accessed=bytes_accessed),
    )(x, wqkv, bqkv)


def init_params(key, hidden_size, num_bins):
    """Deterministic parameter init mirroring the PyTorch module's shapes."""
    ks = jax.random.split(key, 7)
    bound = 1.0 / math.sqrt(hidden_size)

    def linear(kw, kb):
        # PyTorch Linear weight is (out, in); store transposed (in, out).
        w = jax.random.uniform(kw, (hidden_size, hidden_size),
                               minval=-bound, maxval=bound, dtype=jnp.float32)
        b = jax.random.uniform(kb, (1, hidden_size),
                               minval=-bound, maxval=bound, dtype=jnp.float32)
        return w, b

    wq, bq = linear(ks[0], ks[1])
    wk, bk = linear(ks[2], ks[3])
    wv, bv = linear(ks[4], ks[5])

    # vocal_mask: randn(1,1,num_bins)*0.1, then bins 1..80 (< num_bins) set to 1.0
    vocal_mask = jax.random.normal(ks[6], (1, 1, num_bins), dtype=jnp.float32) * 0.1
    vocal_range_bins = np.arange(1, 81)
    vocal_range_bins = vocal_range_bins[vocal_range_bins < num_bins]
    vocal_mask = vocal_mask.at[0, 0, vocal_range_bins].set(1.0)

    return wq, bq, wk, bk, wv, bv, vocal_mask


def reference(x, wq, bq, wk, bk, wv, bv, vocal_mask):
    """Pure-JAX f32 reference of the PyTorch forward pass."""
    H = x.shape[-1]
    q = x @ wq + bq
    k = x @ wk + bk
    v = x @ wv + bv
    scores = jnp.einsum('bqh,bkh->bqk', q, k) / math.sqrt(H)
    attn = jax.nn.softmax(scores, axis=-1)
    out = jnp.einsum('bqk,bkh->bqh', attn, v)
    return out * vocal_mask[:, :, :H]


if __name__ == "__main__":
    B, S, H = 2, 8, 32       # batch, seq, hidden_size
    NUM_BINS = 96            # num_bins >= hidden_size (as the forward slice implies)

    key = jax.random.PRNGKey(0)
    kx, kp = jax.random.split(key)

    x = jax.random.normal(kx, (B, S, H), dtype=jnp.float32)
    wq, bq, wk, bk, wv, bv, vocal_mask = init_params(kp, H, NUM_BINS)

    out = vocal_attention(x, wq, bq, wk, bk, wv, bv, vocal_mask)
    out = jax.block_until_ready(out)

    ref = reference(x, wq, bq, wk, bk, wv, bv, vocal_mask)
    # bf16 MXU inputs (f32 accumulation) -> loosened tolerance vs. the f32 reference.
    np.testing.assert_allclose(np.asarray(out), np.asarray(ref), rtol=2e-2, atol=2e-2)

    print("KERNEL_OK")
</pallas_src>

<mosaic_0001>
module attributes {stable_mosaic.version = 11 : i64} {
  func.func @vocal_attention_kernel(%arg0: i32, %arg1: memref<2x8x32xf32, #tpu.memory_space<vmem>>, %arg2: memref<32x96xbf16, #tpu.memory_space<vmem>>, %arg3: memref<1x96xf32, #tpu.memory_space<vmem>>, %arg4: memref<2x8x32xf32, #tpu.memory_space<vmem>>) attributes {dimension_semantics = [#tpu.dimension_semantics<parallel>], iteration_bounds = array<i64: 1>, scalar_prefetch = 0 : i64, scratch_operands = 0 : i64, tpu.core_type = #tpu.core_type<tc>, window_params = [{transform_indices = @transform_0, window_bounds = array<i64: 2, 8, 32>}, {pipeline_mode = #tpu.pipeline_mode<synchronous>, transform_indices = @transform_1, window_bounds = array<i64: 32, 96>}, {pipeline_mode = #tpu.pipeline_mode<synchronous>, transform_indices = @transform_2, window_bounds = array<i64: 1, 96>}, {transform_indices = @transform_3, window_bounds = array<i64: 2, 8, 32>}]} {
    %c0 = arith.constant 0 : index
    %c0_0 = arith.constant 0 : index
    %c0_1 = arith.constant 0 : index
    %0 = vector.load %arg1[%c0, %c0_0, %c0_1] : memref<2x8x32xf32, #tpu.memory_space<vmem>>, vector<2x8x32xf32>
    %1 = vector.shape_cast %0 : vector<2x8x32xf32> to vector<16x32xf32>
    %2 = arith.truncf %1 : vector<16x32xf32> to vector<16x32xbf16>
    %c0_2 = arith.constant 0 : index
    %c0_3 = arith.constant 0 : index
    %3 = vector.load %arg2[%c0_2, %c0_3] : memref<32x96xbf16, #tpu.memory_space<vmem>>, vector<32x96xbf16>
    %cst = arith.constant dense<0.000000e+00> : vector<16x96xf32>
    %4 = tpu.matmul %2, %3, %cst {dimension_numbers = #tpu.dot_dimension_numbers<[1], [0], [0], [1], [0, 0, 1, 1], [], []>} : vector<16x32xbf16>, vector<32x96xbf16>, vector<16x96xf32> -> vector<16x96xf32>
    %c0_4 = arith.constant 0 : index
    %c0_5 = arith.constant 0 : index
    %5 = vector.load %arg3[%c0_4, %c0_5] : memref<1x96xf32, #tpu.memory_space<vmem>>, vector<1x96xf32>
    %6 = vector.broadcast %5 : vector<1x96xf32> to vector<16x96xf32>
    %7 = arith.addf %4, %6 : vector<16x96xf32>
    %8 = vector.shape_cast %7 : vector<16x96xf32> to vector<2x8x96xf32>
    %9 = vector.extract_strided_slice %8 {offsets = [0, 0, 0], sizes = [2, 8, 32], strides = [1, 1, 1]} : vector<2x8x96xf32> to vector<2x8x32xf32>
    %10 = arith.truncf %9 : vector<2x8x32xf32> to vector<2x8x32xbf16>
    %11 = vector.extract_strided_slice %8 {offsets = [0, 0, 32], sizes = [2, 8, 32], strides = [1, 1, 1]} : vector<2x8x96xf32> to vector<2x8x32xf32>
    %12 = arith.truncf %11 : vector<2x8x32xf32> to vector<2x8x32xbf16>
    %13 = vector.extract_strided_slice %8 {offsets = [0, 0, 64], sizes = [2, 8, 32], strides = [1, 1, 1]} : vector<2x8x96xf32> to vector<2x8x32xf32>
    %14 = arith.truncf %13 : vector<2x8x32xf32> to vector<2x8x32xbf16>
    %cst_6 = arith.constant dense<0.000000e+00> : vector<2x8x8xf32>
    %15 = tpu.matmul %10, %12, %cst_6 {dimension_numbers = #tpu.dot_dimension_numbers<[2], [2], [1], [1], [0, 0, 0, 1, 1, 1], [0], [0]>} : vector<2x8x32xbf16>, vector<2x8x32xbf16>, vector<2x8x8xf32> -> vector<2x8x8xf32>
    %cst_7 = arith.constant dense<0xFF800000> : vector<2x8xf32>
    %16 = vector.multi_reduction <maximumf>, %15, %cst_7 [2] : vector<2x8x8xf32> to vector<2x8xf32>
    %17 = vector.shape_cast %16 : vector<2x8xf32> to vector<2x8x1xf32>
    %18 = vector.broadcast %17 : vector<2x8x1xf32> to vector<2x8x8xf32>
    %19 = arith.subf %15, %18 : vector<2x8x8xf32>
    %20 = math.exp %19 : vector<2x8x8xf32>
    %cst_8 = arith.constant dense<0.000000e+00> : vector<2x8xf32>
    %21 = vector.multi_reduction <add>, %20, %cst_8 [2] : vector<2x8x8xf32> to vector<2x8xf32>
    %22 = vector.shape_cast %21 : vector<2x8xf32> to vector<2x8x1xf32>
    %23 = tpu.reciprocal %22 {approx = true} : vector<2x8x1xf32> -> vector<2x8x1xf32>
    %24 = vector.broadcast %23 : vector<2x8x1xf32> to vector<2x8x8xf32>
    %25 = arith.mulf %20, %24 : vector<2x8x8xf32>
    %26 = arith.truncf %25 : vector<2x8x8xf32> to vector<2x8x8xbf16>
    %cst_9 = arith.constant dense<0.000000e+00> : vector<2x8x32xf32>
    %27 = tpu.matmul %26, %14, %cst_9 {dimension_numbers = #tpu.dot_dimension_numbers<[2], [1], [1], [2], [0, 0, 0, 1, 1, 2], [0], [0]>} : vector<2x8x8xbf16>, vector<2x8x32xbf16>, vector<2x8x32xf32> -> vector<2x8x32xf32>
    %c0_10 = arith.constant 0 : index
    %c0_11 = arith.constant 0 : index
    %c0_12 = arith.constant 0 : index
    %28 = vector.load %arg4[%c0_10, %c0_11, %c0_12] : memref<2x8x32xf32, #tpu.memory_space<vmem>>, vector<2x8x32xf32>
    tpu.vector_store %arg4[%c0_10, %c0_11, %c0_12], %27 {strides = array<i32>} : memref<2x8x32xf32, #tpu.memory_space<vmem>>, vector<2x8x32xf32>,
    return
  }
  func.func @transform_0(%arg0: i32) -> (i32, i32, i32) {
    %c0_i32 = arith.constant 0 : i32
    %c0_i32_0 = arith.constant 0 : i32
    %c0_i32_1 = arith.constant 0 : i32
    return %arg0, %c0_i32, %c0_i32_0 : i32, i32, i32
  }
  func.func @transform_1(%arg0: i32) -> (i32, i32) {
    %c0_i32 = arith.constant 0 : i32
    %c0_i32_0 = arith.constant 0 : i32
    %c0_i32_1 = arith.constant 0 : i32
    return %c0_i32, %c0_i32_0 : i32, i32
  }
  func.func @transform_2(%arg0: i32) -> (i32, i32) {
    %c0_i32 = arith.constant 0 : i32
    %c0_i32_0 = arith.constant 0 : i32
    %c0_i32_1 = arith.constant 0 : i32
    return %c0_i32, %c0_i32_0 : i32, i32
  }
  func.func @transform_3(%arg0: i32) -> (i32, i32, i32) {
    %c0_i32 = arith.constant 0 : i32
    %c0_i32_0 = arith.constant 0 : i32
    %c0_i32_1 = arith.constant 0 : i32
    return %arg0, %c0_i32, %c0_i32_0 : i32, i32, i32
  }
}

</mosaic_0001>

<llo_original>
// kernel: tpu_custom_call.1
$region0: #{tpu_custom_call.1}
  #allocation0 [shape = 'u32[]', space=smem, size = 0x4, offset = 0x4, fixed_abs, tag = 'smem constant byte address 0x4 - core index']
  #allocation1 [shape = 'u32[144,128]{1,0:T(1,128)}', space=vmem, size = 0x12000, scoped, tag = 'internal scratch']
  %s0 = inlined_call_operand.hbm [shape: f32[2,8,32], index: 0, kind: input, shape index: {}]
  %s1 = inlined_call_operand.hbm [shape: bf16[32,96], index: 1, kind: input, shape index: {}]
  %s2 = inlined_call_operand.vmem [shape: f32[1,96], index: 2, kind: input, shape index: {}]
  %s3 = inlined_call_operand.hbm [shape: f32[2,8,32], index: 3, kind: output, shape index: {}]
  %s4 = sld [smem:[#allocation0]]
  $region30: #{tpu_custom_call.1} parent=0
    _
  %s6 = ssub.s32 1, %s4
  %s7 = scalar_select 0, %s6, %s4
  $region1: #{tpu_custom_call.1} parent=0
    #allocation2 [shape = 'u8[8192]{0}', space=vmem, size = 0x2000, scoped, tag = 'input window, operand 0, single buffered']
    #allocation3 [shape = 's32[1]{0}', space=sflag, size = 0x4, scoped, tag = 'scoped memory for tpu_custom_call.1']
    #allocation4 [shape = 's32[1]{0}', space=sflag, size = 0x4, scoped, tag = 'scoped memory for tpu_custom_call.1']
    #allocation5 [shape = 'u8[8192]{0}', space=vmem, size = 0x2000, scoped, tag = 'input window, operand 1, single buffered']
    #allocation6 [shape = 's32[1]{0}', space=sflag, size = 0x4, scoped, tag = 'scoped memory for tpu_custom_call.1']
    #allocation7 [shape = 'u8[8192]{0}', space=vmem, size = 0x2000, scoped, tag = 'output window, operand 0, single buffered']
    %8 = vsyncpa [#allocation3], 0
    %9 = vsyncpa [#allocation6], 0
    %10 = vsyncpa [#allocation4], 0
    // Predicated region
    $region2: #{tpu_custom_call.1} parent=1 // pred_check
      _
    $region3: #{tpu_custom_call.1} parent=1 // pred_check_branch
      %12 = sbr.rel (0) target = $region5
    $region4: #{tpu_custom_call.1} parent=1 // pred_region
      %s14 = ssub.s32 256, 256
      %15 = vsyncadd [#allocation3], %s14
      %s16 = sshll.u32 [#allocation2], 4
      %s17 = int_to_ptr.vmem [resolvable:$true] %s16
      %22 = dma.hbm_to_vmem [thread:$0]  %s0, 256, %s17, [#allocation3], 128, 128, 8
    $region5: #{tpu_custom_call.1} parent=1 // pred_fallthru
      _
    // Predicated region
    $region6: #{tpu_custom_call.1} parent=1 // pred_check
      _
    $region7: #{tpu_custom_call.1} parent=1 // pred_check_branch
      %24 = sbr.rel (0) target = $region9
    $region8: #{tpu_custom_call.1} parent=1 // pred_region
      %s26 = ssub.s32 256, 256
      %27 = vsyncadd [#allocation6], %s26
      %s28 = sshll.u32 [#allocation5], 4
      %s29 = int_to_ptr.vmem [resolvable:$true] %s28
      %34 = dma.hbm_to_vmem [thread:$0]  %s1, 256, %s29, [#allocation6], 64, 64, 4
    $region9: #{tpu_custom_call.1} parent=1 // pred_fallthru
      _
    // Predicated region
    $region10: #{tpu_custom_call.1} parent=1 // pred_check
      _
    $region11: #{tpu_custom_call.1} parent=1 // pred_check_branch
      %36 = sbr.rel (0) target = $region13
    $region12: #{tpu_custom_call.1} parent=1 // pred_region
      _
    $region13: #{tpu_custom_call.1} parent=1 // pred_fallthru
      _
    // Predicated region
    $region14: #{tpu_custom_call.1} parent=1 // pred_check
      _
    $region15: #{tpu_custom_call.1} parent=1 // pred_check_branch
      %38 = sbr.rel (0) target = $region17
    $region16: #{tpu_custom_call.1} parent=1 // pred_region
      %39 = dma.done [#allocation3], 256
    $region17: #{tpu_custom_call.1} parent=1 // pred_fallthru
      _
    // Predicated region
    $region18: #{tpu_custom_call.1} parent=1 // pred_check
      _
    $region19: #{tpu_custom_call.1} parent=1 // pred_check_branch
      %41 = sbr.rel (0) target = $region21
    $region20: #{tpu_custom_call.1} parent=1 // pred_region
      %42 = dma.done [#allocation6], 256
    $region21: #{tpu_custom_call.1} parent=1 // pred_fallthru
      _
    %v44 = vld [vmem:[#allocation2] sm:$0xff]
    %v45 = vld [vmem:[#allocation2 + $0x8] sm:$0xff]
    %v46 = vpack.c.bf16 %v45, %v44
    %v47 = vld [vmem:[#allocation5] sm:$0xf]
    %v48 = vld [vmem:[#allocation5 + $0x4] sm:$0xf]
    %v49 = vld [vmem:[#allocation5 + $0x8] sm:$0xf]
    %v50 = vld [vmem:[#allocation5 + $0xc] sm:$0xf]
    %v51 = vld [vmem:[%s2] sm:$0x1]
    %v53 = vlaneseq
    %v54 = vshrl.u32 %v53, 7
    %v55 = vsub.s32 0, %v54
    %v56 = vrot.slane %v51, %v55
    %v62 = vunpack.c.l.b16 %v47
    %v63 = vunpack.c.l.b16 %v48
    %v64 = vunpack.c.l.b16 %v49
    %v65 = vunpack.c.l.b16 %v50
    %v66 = vpack.c.b16 %v63, %v62
    %v67 = vpack.c.b16 %v65, %v64
    %vm70 = vcmask 261120
    %v72 = vsel %vm70, %v46, 0
    %74 = vmatprep.subr.bf16.mxu0 0
    %75 = vmatpush1.bf16.msra.mxu0 %v66
    %76 = vmatprep.subr.bf16.mxu0 0
    %77 = vmatpush1.bf16.msra.mxu0 %v67
    %78 = vmatprep.subr.bf16.mxu0 0
    %79 = vmatpush1.bf16.msra.mxu0 0
    %80 = vmatprep.subr.bf16.mxu0 0
    %81 = vmatpush1.bf16.msra.mxu0 0
    %82 = vmatprep.subr.bf16.mxu0 0
    %83 = vmatpush1.bf16.msra.mxu0 0
    %84 = vmatprep.subr.bf16.mxu0 0
    %85 = vmatpush1.bf16.msra.mxu0 0
    %86 = vmatprep.subr.bf16.mxu0 0
    %87 = vmatpush1.bf16.msra.mxu0 0
    %88 = vmatprep.subr.bf16.mxu0 0
    %89 = vmatpush1.bf16.msra.mxu0 0
    %90 = vmatprep.subr.bf16.mxu0 0
    %91 = vmatpush1.bf16.msra.mxu0 0
    %92 = vmatprep.subr.bf16.mxu0 0
    %93 = vmatpush1.bf16.msra.mxu0 0
    %94 = vmatprep.subr.bf16.mxu0 0
    %95 = vmatpush1.bf16.msra.mxu0 0
    %96 = vmatprep.subr.bf16.mxu0 0
    %97 = vmatpush1.bf16.msra.mxu0 0
    %98 = vmatprep.subr.bf16.mxu0 0
    %99 = vmatpush1.bf16.msra.mxu0 0
    %100 = vmatprep.subr.bf16.mxu0 0
    %101 = vmatpush1.bf16.msra.mxu0 0
    %102 = vmatprep.subr.bf16.mxu0 0
    %103 = vmatpush1.bf16.msra.mxu0 0
    %104 = vmatprep.subr.bf16.mxu0 0
    %105 = vmatpush1.bf16.msra.mxu0 0
    %106 = vmatprep.mubr.bf16.mxu0 0
    %107 = vmatmul.mubr.bf16.gmra.mrb[0].mxu0 %v72
    %v108 = vpop.f32.mrb[0].mxu0
    %v109 = vadd.f32 %v56, %v108
    %v110 = vpop.f32.mrb[0].mxu0
    %v111 = vpop.f32.mrb[0].mxu0
    %v112 = vadd.f32 %v56, %v111
    %v113 = vpop.f32.mrb[0].mxu0
    %114 = vdwg.mxu0
    %v115 = vpack.c.bf16 %v109, %v109
    %v116 = vpack.c.bf16 %v112, %v112
    %118 = vrot.lane.b32.xlu0 %v115, 96
    %v119 = vpop.permute.xlu0 %118
    %v121 = vsel %vm70, %v115, 0
    %v124 = vsel %vm70, %v119, 0
    %126 = vmatprep.subr.bf16.mxu0 0
    %127 = vmatpush1.bf16.xpose.msra.mxu0 %v124
    %128 = vmatprep.subr.bf16.mxu0 0
    %129 = vmatpush1.bf16.xpose.msra.mxu0 0
    %130 = vmatprep.subr.bf16.mxu0 0
    %131 = vmatpush1.bf16.xpose.msra.mxu0 0
    %132 = vmatprep.subr.bf16.mxu0 0
    %133 = vmatpush1.bf16.xpose.msra.mxu0 0
    %134 = vmatprep.subr.bf16.mxu0 0
    %135 = vmatpush1.bf16.xpose.msra.mxu0 0
    %136 = vmatprep.subr.bf16.mxu0 0
    %137 = vmatpush1.bf16.xpose.msra.mxu0 0
    %138 = vmatprep.subr.bf16.mxu0 0
    %139 = vmatpush1.bf16.xpose.msra.mxu0 0
    %140 = vmatprep.subr.bf16.mxu0 0
    %141 = vmatpush1.bf16.xpose.msra.mxu0 0
    %142 = vmatprep.subr.bf16.mxu0 0
    %143 = vmatpush1.bf16.xpose.msra.mxu0 0
    %144 = vmatprep.subr.bf16.mxu0 0
    %145 = vmatpush1.bf16.xpose.msra.mxu0 0
    %146 = vmatprep.subr.bf16.mxu0 0
    %147 = vmatpush1.bf16.xpose.msra.mxu0 0
    %148 = vmatprep.subr.bf16.mxu0 0
    %149 = vmatpush1.bf16.xpose.msra.mxu0 0
    %150 = vmatprep.subr.bf16.mxu0 0
    %151 = vmatpush1.bf16.xpose.msra.mxu0 0
    %152 = vmatprep.subr.bf16.mxu0 0
    %153 = vmatpush1.bf16.xpose.msra.mxu0 0
    %154 = vmatprep.subr.bf16.mxu0 0
    %155 = vmatpush1.bf16.xpose.msra.mxu0 0
    %156 = vmatprep.subr.bf16.mxu0 0
    %157 = vmatpush1.bf16.xpose.msra.mxu0 0
    %158 = vmatprep.mubr.bf16.mxu0 0
    %159 = vmatmul.mubr.bf16.gmra.mrb[0].mxu0 %v121
    %v160 = vpop.f32.mrb[0].mxu0
    %v161 = vadd.f32 0.0, %v160
    %v162 = vpop.f32.mrb[0].mxu0
    %v163 = vpop.f32.mrb[0].mxu0
    %v164 = vpop.f32.mrb[0].mxu0
    %165 = vdwg.mxu0
    %167 = vrot.lane.b32.xlu0 %v116, 96
    %v168 = vpop.permute.xlu0 %167
    %v170 = vsel %vm70, %v116, 0
    %v173 = vsel %vm70, %v168, 0
    %175 = vmatprep.subr.bf16.mxu0 0
    %176 = vmatpush1.bf16.xpose.msra.mxu0 %v173
    %177 = vmatprep.subr.bf16.mxu0 0
    %178 = vmatpush1.bf16.xpose.msra.mxu0 0
    %179 = vmatprep.subr.bf16.mxu0 0
    %180 = vmatpush1.bf16.xpose.msra.mxu0 0
    %181 = vmatprep.subr.bf16.mxu0 0
    %182 = vmatpush1.bf16.xpose.msra.mxu0 0
    %183 = vmatprep.subr.bf16.mxu0 0
    %184 = vmatpush1.bf16.xpose.msra.mxu0 0
    %185 = vmatprep.subr.bf16.mxu0 0
    %186 = vmatpush1.bf16.xpose.msra.mxu0 0
    %187 = vmatprep.subr.bf16.mxu0 0
    %188 = vmatpush1.bf16.xpose.msra.mxu0 0
    %189 = vmatprep.subr.bf16.mxu0 0
    %190 = vmatpush1.bf16.xpose.msra.mxu0 0
    %191 = vmatprep.subr.bf16.mxu0 0
    %192 = vmatpush1.bf16.xpose.msra.mxu0 0
    %193 = vmatprep.subr.bf16.mxu0 0
    %194 = vmatpush1.bf16.xpose.msra.mxu0 0
    %195 = vmatprep.subr.bf16.mxu0 0
    %196 = vmatpush1.bf16.xpose.msra.mxu0 0
    %197 = vmatprep.subr.bf16.mxu0 0
    %198 = vmatpush1.bf16.xpose.msra.mxu0 0
    %199 = vmatprep.subr.bf16.mxu0 0
    %200 = vmatpush1.bf16.xpose.msra.mxu0 0
    %201 = vmatprep.subr.bf16.mxu0 0
    %202 = vmatpush1.bf16.xpose.msra.mxu0 0
    %203 = vmatprep.subr.bf16.mxu0 0
    %204 = vmatpush1.bf16.xpose.msra.mxu0 0
    %205 = vmatprep.subr.bf16.mxu0 0
    %206 = vmatpush1.bf16.xpose.msra.mxu0 0
    %207 = vmatprep.mubr.bf16.mxu0 0
    %208 = vmatmul.mubr.bf16.gmra.mrb[0].mxu0 %v170
    %v209 = vpop.f32.mrb[0].mxu0
    %v210 = vadd.f32 0.0, %v209
    %v211 = vpop.f32.mrb[0].mxu0
    %v212 = vpop.f32.mrb[0].mxu0
    %v213 = vpop.f32.mrb[0].mxu0
    %214 = vdwg.mxu0
    %vm215 = vcmask 64512
    %v216 = vsel %vm215, %v161, -inf
    %217 = vmax.xlane.f32.xlu0 %v216
    %v218 = vpop.xlane.xlu0 %217
    %v219 = vsel %vm215, %v210, -inf
    %220 = vmax.xlane.f32.xlu0 %v219
    %v221 = vpop.xlane.xlu0 %220
    %v222 = vsub.f32 %v161, %v218
    %v223 = vsub.f32 %v210, %v221
    %v224 = vmul.f32 %v222, 1.442695
    %v225 = vpow.pop %v224
    %v226 = vmul.f32 %v223, 1.442695
    %v227 = vpow.pop %v226
    %v228 = vsel %vm215, %v225, 0.0
    %229 = vadd.xlane.f32.xlu0 %v228
    %v230 = vpop.xlane.xlu0 %229
    %v231 = vsel %vm215, %v227, 0.0
    %232 = vadd.xlane.f32.xlu0 %v231
    %v233 = vpop.xlane.xlu0 %232
    %v234 = vrcp.pop %v230
    %v235 = vrcp.pop %v233
    %v236 = vmul.f32 %v225, %v234
    %v237 = vmul.f32 %v227, %v235
    %v238 = vpack.c.bf16 %v236, %v236
    %v239 = vpack.c.bf16 %v237, %v237
    %240 = vrot.lane.b32.xlu0 %v115, 64
    %v241 = vpop.permute.xlu0 %240
    %v243 = vsel %vm215, %v238, 0
    %vm245 = vcmask 1043456
    %v247 = vsel %vm245, %v241, 0
    %249 = vmatprep.subr.bf16.mxu0 0
    %250 = vmatpush1.bf16.msra.mxu0 %v247
    %251 = vmatprep.subr.bf16.mxu0 0
    %252 = vmatpush1.bf16.msra.mxu0 0
    %253 = vmatprep.subr.bf16.mxu0 0
    %254 = vmatpush1.bf16.msra.mxu0 0
    %255 = vmatprep.subr.bf16.mxu0 0
    %256 = vmatpush1.bf16.msra.mxu0 0
    %257 = vmatprep.subr.bf16.mxu0 0
    %258 = vmatpush1.bf16.msra.mxu0 0
    %259 = vmatprep.subr.bf16.mxu0 0
    %260 = vmatpush1.bf16.msra.mxu0 0
    %261 = vmatprep.subr.bf16.mxu0 0
    %262 = vmatpush1.bf16.msra.mxu0 0
    %263 = vmatprep.subr.bf16.mxu0 0
    %264 = vmatpush1.bf16.msra.mxu0 0
    %265 = vmatprep.subr.bf16.mxu0 0
    %266 = vmatpush1.bf16.msra.mxu0 0
    %267 = vmatprep.subr.bf16.mxu0 0
    %268 = vmatpush1.bf16.msra.mxu0 0
    %269 = vmatprep.subr.bf16.mxu0 0
    %270 = vmatpush1.bf16.msra.mxu0 0
    %271 = vmatprep.subr.bf16.mxu0 0
    %272 = vmatpush1.bf16.msra.mxu0 0
    %273 = vmatprep.subr.bf16.mxu0 0
    %274 = vmatpush1.bf16.msra.mxu0 0
    %275 = vmatprep.subr.bf16.mxu0 0
    %276 = vmatpush1.bf16.msra.mxu0 0
    %277 = vmatprep.subr.bf16.mxu0 0
    %278 = vmatpush1.bf16.msra.mxu0 0
    %279 = vmatprep.subr.bf16.mxu0 0
    %280 = vmatpush1.bf16.msra.mxu0 0
    %281 = vmatprep.mubr.bf16.mxu0 0
    %282 = vmatmul.mubr.bf16.gmra.mrb[0].mxu0 %v243
    %v283 = vpop.f32.mrb[0].mxu0
    %v284 = vadd.f32 0.0, %v283
    %v285 = vpop.f32.mrb[0].mxu0
    %v286 = vpop.f32.mrb[0].mxu0
    %v287 = vpop.f32.mrb[0].mxu0
    %288 = vdwg.mxu0
    %289 = vrot.lane.b32.xlu0 %v116, 64
    %v290 = vpop.permute.xlu0 %289
    %v292 = vsel %vm215, %v239, 0
    %v295 = vsel %vm245, %v290, 0
    %297 = vmatprep.subr.bf16.mxu0 0
    %298 = vmatpush1.bf16.msra.mxu0 %v295
    %299 = vmatprep.subr.bf16.mxu0 0
    %300 = vmatpush1.bf16.msra.mxu0 0
    %301 = vmatprep.subr.bf16.mxu0 0
    %302 = vmatpush1.bf16.msra.mxu0 0
    %303 = vmatprep.subr.bf16.mxu0 0
    %304 = vmatpush1.bf16.msra.mxu0 0
    %305 = vmatprep.subr.bf16.mxu0 0
    %306 = vmatpush1.bf16.msra.mxu0 0
    %307 = vmatprep.subr.bf16.mxu0 0
    %308 = vmatpush1.bf16.msra.mxu0 0
    %309 = vmatprep.subr.bf16.mxu0 0
    %310 = vmatpush1.bf16.msra.mxu0 0
    %311 = vmatprep.subr.bf16.mxu0 0
    %312 = vmatpush1.bf16.msra.mxu0 0
    %313 = vmatprep.subr.bf16.mxu0 0
    %314 = vmatpush1.bf16.msra.mxu0 0
    %315 = vmatprep.subr.bf16.mxu0 0
    %316 = vmatpush1.bf16.msra.mxu0 0
    %317 = vmatprep.subr.bf16.mxu0 0
    %318 = vmatpush1.bf16.msra.mxu0 0
    %319 = vmatprep.subr.bf16.mxu0 0
    %320 = vmatpush1.bf16.msra.mxu0 0
    %321 = vmatprep.subr.bf16.mxu0 0
    %322 = vmatpush1.bf16.msra.mxu0 0
    %323 = vmatprep.subr.bf16.mxu0 0
    %324 = vmatpush1.bf16.msra.mxu0 0
    %325 = vmatprep.subr.bf16.mxu0 0
    %326 = vmatpush1.bf16.msra.mxu0 0
    %327 = vmatprep.subr.bf16.mxu0 0
    %328 = vmatpush1.bf16.msra.mxu0 0
    %329 = vmatprep.mubr.bf16.mxu0 0
    %330 = vmatmul.mubr.bf16.gmra.mrb[0].mxu0 %v292
    %v331 = vpop.f32.mrb[0].mxu0
    %v332 = vadd.f32 0.0, %v331
    %v333 = vpop.f32.mrb[0].mxu0
    %v334 = vpop.f32.mrb[0].mxu0
    %v335 = vpop.f32.mrb[0].mxu0
    %336 = vdwg.mxu0
    %337 = vst.msk [vmem:[#allocation7] sm:$0xff] %vm70, %v284
    %338 = vst.msk [vmem:[#allocation7 + $0x8] sm:$0xff] %vm70, %v332
    // Predicated region
    $region22: #{tpu_custom_call.1} parent=1 // pred_check
      _
    $region23: #{tpu_custom_call.1} parent=1 // pred_check_branch
      %340 = sbr.rel (0) target = $region25
    $region24: #{tpu_custom_call.1} parent=1 // pred_region
      %s342 = ssub.s32 256, 256
      %343 = vsyncadd [#allocation4], %s342
      %s344 = sshll.u32 [#allocation7], 4
      %s345 = int_to_ptr.vmem [resolvable:$true] %s344
      %350 = dma.vmem_to_hbm [thread:$0]  %s345, 256, %s3, [#allocation4], 128, 128, 8
    $region25: #{tpu_custom_call.1} parent=1 // pred_fallthru
      _
    // Predicated region
    $region26: #{tpu_custom_call.1} parent=1 // pred_check
      _
    $region27: #{tpu_custom_call.1} parent=1 // pred_check_branch
      %352 = sbr.rel (0) target = $region29
    $region28: #{tpu_custom_call.1} parent=1 // pred_region
      %353 = dma.done [#allocation4], 256
    $region29: #{tpu_custom_call.1} parent=1 // pred_fallthru
      _
    %354 = vsyncpa [#allocation3], 1
    %355 = vsyncpa [#allocation6], 1
    %356 = vsyncpa [#allocation4], 1

</llo_original>
